<compile_context>
chip_gen: v6e
topology: v6e:2x2x1
jax: 0.10.0
libtpu: 0.0.40
codegen_flags: <defaults>
</compile_context>

<pallas_src>
import functools
import math

import jax
import jax.numpy as jnp
from jax.experimental import pallas as pl
from jax.experimental.pallas import tpu as pltpu


def _round_up(v, m):
    return (v + m - 1) // m * m


def _sage_kernel(a_ref, x_ref, wt_ref, b_ref, gamma_ref, beta_ref, out_ref,
                 acc_ref, *, n_feat_out, eps):
    i = pl.program_id(0)        # node-row tile        ("parallel")
    k = pl.program_id(1)        # aggregation K tile   ("arbitrary" reduction)

    @pl.when(k == 0)
    def _():
        acc_ref[...] = jnp.zeros_like(acc_ref)

    # (A + I) tile for this (i, k) block: add 1 on the global diagonal.
    a = a_ref[...]
    tm, tk = a.shape
    row_ids = i * tm + jax.lax.broadcasted_iota(jnp.int32, (tm, tk), 0)
    col_ids = k * tk + jax.lax.broadcasted_iota(jnp.int32, (tm, tk), 1)
    a = a + jnp.where(row_ids == col_ids, 1.0, 0.0).astype(a.dtype)

    # h_hat accumulation on the MXU: bf16 operands, f32 accumulate in VMEM.
    acc_ref[...] += jnp.dot(a.astype(jnp.bfloat16),
                            x_ref[...].astype(jnp.bfloat16),
                            preferred_element_type=jnp.float32)

    @pl.when(k == pl.num_programs(1) - 1)
    def _():
        h_hat = acc_ref[...]
        # Linear (bf16 MXU, f32 accumulate) + bias + ReLU.
        y = jnp.dot(h_hat.astype(jnp.bfloat16), wt_ref[...].astype(jnp.bfloat16),
                    preferred_element_type=jnp.float32)
        y = jnp.maximum(y + b_ref[...], 0.0)
        # LayerNorm over the *real* feature columns. Padded columns of y are
        # exactly zero (zero-padded W columns and bias), so plain lane sums are
        # correct; E[y^2] - E[y]^2 keeps the zero pad out of the variance.
        inv_n = 1.0 / n_feat_out
        mean = jnp.sum(y, axis=-1, keepdims=True) * inv_n
        var = jnp.sum(y * y, axis=-1, keepdims=True) * inv_n - mean * mean
        y = (y - mean) * jax.lax.rsqrt(var + eps)
        out_ref[...] = (y * gamma_ref[...] + beta_ref[...]).astype(out_ref.dtype)


@functools.partial(jax.jit, static_argnames=("eps", "block_m", "block_k"))
def graphsage_forward(x, a, w, b, gamma, beta, *, eps=1e-5,
                      block_m=128, block_k=128):
    """x: (N, F_in) node features; a: (N, N) adjacency (self loops added inside);
    w: (F_out, F_in) nn.Linear weight; b, gamma, beta: (F_out,)."""
    n, f_in = x.shape
    f_out = w.shape[0]

    lcm = block_m * block_k // math.gcd(block_m, block_k)
    n_pad = _round_up(n, lcm)
    f_in_pad = _round_up(f_in, 128)
    f_out_pad = _round_up(f_out, 128)

    # Zero-pad to TPU-friendly shapes (128-lane feature dims, tiled node dim).
    xp = jnp.zeros((n_pad, f_in_pad), jnp.float32).at[:n, :f_in].set(x)
    ap = jnp.zeros((n_pad, n_pad), jnp.float32).at[:n, :n].set(a)
    wt = jnp.zeros((f_in_pad, f_out_pad), jnp.float32).at[:f_in, :f_out].set(w.T)
    bp = jnp.zeros((1, f_out_pad), jnp.float32).at[0, :f_out].set(b)
    gp = jnp.zeros((1, f_out_pad), jnp.float32).at[0, :f_out].set(gamma)
    betap = jnp.zeros((1, f_out_pad), jnp.float32).at[0, :f_out].set(beta)

    grid = (n_pad // block_m, n_pad // block_k)
    kernel = functools.partial(_sage_kernel, n_feat_out=float(f_out), eps=eps)

    flops = 2 * n_pad * n_pad * f_in_pad + 2 * n_pad * f_in_pad * f_out_pad
    bytes_accessed = 4 * (n_pad * n_pad                  # adj read once
                          + n_pad * f_in_pad * grid[0]   # X re-read per row tile
                          + f_in_pad * f_out_pad
                          + n_pad * f_out_pad)

    out = pl.pallas_call(
        kernel,
        out_shape=jax.ShapeDtypeStruct((n_pad, f_out_pad), jnp.float32),
        grid_spec=pltpu.PrefetchScalarGridSpec(
            num_scalar_prefetch=0,
            grid=grid,
            in_specs=[
                pl.BlockSpec((block_m, block_k), lambda i, k: (i, k)),      # A
                pl.BlockSpec((block_k, f_in_pad), lambda i, k: (k, 0)),     # X
                pl.BlockSpec((f_in_pad, f_out_pad), lambda i, k: (0, 0)),   # W^T
                pl.BlockSpec((1, f_out_pad), lambda i, k: (0, 0)),          # b
                pl.BlockSpec((1, f_out_pad), lambda i, k: (0, 0)),          # gamma
                pl.BlockSpec((1, f_out_pad), lambda i, k: (0, 0)),          # beta
            ],
            out_specs=pl.BlockSpec((block_m, f_out_pad), lambda i, k: (i, 0)),
            scratch_shapes=[pltpu.VMEM((block_m, f_in_pad), jnp.float32)],
        ),
        compiler_params=pltpu.CompilerParams(
            dimension_semantics=("parallel", "arbitrary"),
            vmem_limit_bytes=32 << 20,   # stays well inside v7x's 64 MiB VMEM
        ),
        cost_estimate=pl.CostEstimate(flops=flops, transcendentals=0,
                                      bytes_accessed=bytes_accessed),
    )(ap, xp, wt, bp, gp, betap)

    return out[:n, :f_out]


def init_graphsage_params(key, input_feat, output_feat):
    """Mimics the PyTorch module: xavier_uniform_ linear weight, default
    nn.Linear bias init U(-1/sqrt(fan_in), 1/sqrt(fan_in)), LayerNorm
    gamma=1 / beta=0."""
    kw, kb = jax.random.split(key)
    limit = math.sqrt(6.0 / (input_feat + output_feat))
    w = jax.random.uniform(kw, (output_feat, input_feat), jnp.float32, -limit, limit)
    bound = 1.0 / math.sqrt(input_feat)
    b = jax.random.uniform(kb, (output_feat,), jnp.float32, -bound, bound)
    gamma = jnp.ones((output_feat,), jnp.float32)
    beta = jnp.zeros((output_feat,), jnp.float32)
    return w, b, gamma, beta


def _reference(x, a, w, b, gamma, beta, eps=1e-5):
    """Pure-JAX reference mirroring the kernel's bf16-MXU / f32-accumulate
    numerics (PyTorch runs full f32; relax tolerance if comparing to that)."""
    n = x.shape[0]
    a_hat = a + jnp.eye(n, dtype=a.dtype)
    h_hat = jnp.dot(a_hat.astype(jnp.bfloat16), x.astype(jnp.bfloat16),
                    preferred_element_type=jnp.float32)
    y = jnp.dot(h_hat.astype(jnp.bfloat16), w.T.astype(jnp.bfloat16),
                preferred_element_type=jnp.float32) + b
    y = jnp.maximum(y, 0.0)
    mean = jnp.mean(y, axis=-1, keepdims=True)
    var = jnp.mean(jnp.square(y - mean), axis=-1, keepdims=True)
    return (y - mean) * jax.lax.rsqrt(var + eps) * gamma + beta


if __name__ == "__main__":
    key = jax.random.PRNGKey(0)
    k_x, k_a, k_p = jax.random.split(key, 3)

    # Small graph consistent with the module's forward: N nodes, F_in -> F_out.
    # Deliberately non-multiples of the tile/lane sizes to exercise padding.
    N, F_IN, F_OUT = 200, 48, 24

    x = jax.random.normal(k_x, (N, F_IN), jnp.float32)

    # Random symmetric 0/1 adjacency without self loops (the kernel adds +I).
    a = (jax.random.uniform(k_a, (N, N)) > 0.9).astype(jnp.float32)
    a = jnp.maximum(a, a.T) * (1.0 - jnp.eye(N, dtype=jnp.float32))

    w, b, gamma, beta = init_graphsage_params(k_p, F_IN, F_OUT)

    out = graphsage_forward(x, a, w, b, gamma, beta)
    out = jax.block_until_ready(out)

    ref = _reference(x, a, w, b, gamma, beta)
    assert out.shape == (N, F_OUT)
    assert jnp.allclose(out, ref, atol=5e-3, rtol=5e-3), (
        "mismatch vs reference: max abs diff = "
        f"{float(jnp.max(jnp.abs(out - ref)))}")

    print("KERNEL_OK")
</pallas_src>

<mosaic_0001>
module attributes {stable_mosaic.version = 11 : i64} {
  func.func @_sage_kernel(%arg0: i32, %arg1: i32, %arg2: memref<128x128xf32, #tpu.memory_space<vmem>>, %arg3: memref<128x128xf32, #tpu.memory_space<vmem>>, %arg4: memref<128x128xf32, #tpu.memory_space<vmem>>, %arg5: memref<1x128xf32, #tpu.memory_space<vmem>>, %arg6: memref<1x128xf32, #tpu.memory_space<vmem>>, %arg7: memref<1x128xf32, #tpu.memory_space<vmem>>, %arg8: memref<128x128xf32, #tpu.memory_space<vmem>>, %arg9: memref<128x128xf32, #tpu.memory_space<vmem>>) attributes {dimension_semantics = [#tpu.dimension_semantics<parallel>, #tpu.dimension_semantics<arbitrary>], iteration_bounds = array<i64: 2, 2>, scalar_prefetch = 0 : i64, scratch_operands = 1 : i64, tpu.core_type = #tpu.core_type<tc>, window_params = [{transform_indices = @transform_0, window_bounds = array<i64: 128, 128>}, {transform_indices = @transform_1, window_bounds = array<i64: 128, 128>}, {pipeline_mode = #tpu.pipeline_mode<synchronous>, transform_indices = @transform_2, window_bounds = array<i64: 128, 128>}, {pipeline_mode = #tpu.pipeline_mode<synchronous>, transform_indices = @transform_3, window_bounds = array<i64: 1, 128>}, {pipeline_mode = #tpu.pipeline_mode<synchronous>, transform_indices = @transform_4, window_bounds = array<i64: 1, 128>}, {pipeline_mode = #tpu.pipeline_mode<synchronous>, transform_indices = @transform_5, window_bounds = array<i64: 1, 128>}, {transform_indices = @transform_6, window_bounds = array<i64: 128, 128>}]} {
    %c0_i32 = arith.constant 0 : i32
    %0 = arith.cmpi eq, %arg1, %c0_i32 : i32
    %1 = arith.extui %0 : i1 to i32
    %c0_i32_0 = arith.constant 0 : i32
    %2 = arith.cmpi ne, %1, %c0_i32_0 : i32
    scf.if %2 {
      %cst_12 = arith.constant 0.000000e+00 : f32
      %27 = vector.broadcast %cst_12 : f32 to vector<128x128xf32>
      %c0_13 = arith.constant 0 : index
      %c0_14 = arith.constant 0 : index
      %28 = vector.load %arg9[%c0_13, %c0_14] : memref<128x128xf32, #tpu.memory_space<vmem>>, vector<128x128xf32>
      tpu.vector_store %arg9[%c0_13, %c0_14], %27 {strides = array<i32>} : memref<128x128xf32, #tpu.memory_space<vmem>>, vector<128x128xf32>,
    } else {
    }
    %c0 = arith.constant 0 : index
    %c0_1 = arith.constant 0 : index
    %3 = vector.load %arg2[%c0, %c0_1] : memref<128x128xf32, #tpu.memory_space<vmem>>, vector<128x128xf32>
    %c128_i32 = arith.constant 128 : i32
    %4 = arith.muli %arg0, %c128_i32 : i32
    %5 = tpu.iota {dimensions = array<i32: 0>} : vector<128x128xi32>
    %6 = vector.broadcast %4 : i32 to vector<128x128xi32>
    %7 = arith.addi %6, %5 : vector<128x128xi32>
    %c128_i32_2 = arith.constant 128 : i32
    %8 = arith.muli %arg1, %c128_i32_2 : i32
    %9 = tpu.iota {dimensions = array<i32: 1>} : vector<128x128xi32>
    %10 = vector.broadcast %8 : i32 to vector<128x128xi32>
    %11 = arith.addi %10, %9 : vector<128x128xi32>
    %12 = arith.cmpi eq, %7, %11 : vector<128x128xi32>
    %cst = arith.constant 1.000000e+00 : f32
    %cst_3 = arith.constant 0.000000e+00 : f32
    %13 = vector.broadcast %cst : f32 to vector<128x128xf32>
    %14 = vector.broadcast %cst_3 : f32 to vector<128x128xf32>
    %15 = arith.select %12, %13, %14 : vector<128x128xi1>, vector<128x128xf32>
    %16 = arith.addf %3, %15 : vector<128x128xf32>
    %c0_4 = arith.constant 0 : index
    %c0_5 = arith.constant 0 : index
    %17 = vector.load %arg9[%c0_4, %c0_5] : memref<128x128xf32, #tpu.memory_space<vmem>>, vector<128x128xf32>
    %18 = arith.truncf %16 : vector<128x128xf32> to vector<128x128xbf16>
    %c0_6 = arith.constant 0 : index
    %c0_7 = arith.constant 0 : index
    %19 = vector.load %arg3[%c0_6, %c0_7] : memref<128x128xf32, #tpu.memory_space<vmem>>, vector<128x128xf32>
    %20 = arith.truncf %19 : vector<128x128xf32> to vector<128x128xbf16>
    %cst_8 = arith.constant dense<0.000000e+00> : vector<128x128xf32>
    %21 = tpu.matmul %18, %20, %cst_8 {dimension_numbers = #tpu.dot_dimension_numbers<[1], [0], [0], [1], [0, 0, 1, 1], [], []>} : vector<128x128xbf16>, vector<128x128xbf16>, vector<128x128xf32> -> vector<128x128xf32>
    %22 = arith.addf %17, %21 : vector<128x128xf32>
    %c0_9 = arith.constant 0 : index
    %c0_10 = arith.constant 0 : index
    %23 = vector.load %arg9[%c0_9, %c0_10] : memref<128x128xf32, #tpu.memory_space<vmem>>, vector<128x128xf32>
    tpu.vector_store %arg9[%c0_9, %c0_10], %22 {strides = array<i32>} : memref<128x128xf32, #tpu.memory_space<vmem>>, vector<128x128xf32>,
    %c1_i32 = arith.constant 1 : i32
    %24 = arith.cmpi eq, %arg1, %c1_i32 : i32
    %25 = arith.extui %24 : i1 to i32
    %c0_i32_11 = arith.constant 0 : i32
    %26 = arith.cmpi ne, %25, %c0_i32_11 : i32
    scf.if %26 {
      %c0_12 = arith.constant 0 : index
      %c0_13 = arith.constant 0 : index
      %27 = vector.load %arg9[%c0_12, %c0_13] : memref<128x128xf32, #tpu.memory_space<vmem>>, vector<128x128xf32>
      %28 = arith.truncf %27 : vector<128x128xf32> to vector<128x128xbf16>
      %c0_14 = arith.constant 0 : index
      %c0_15 = arith.constant 0 : index
      %29 = vector.load %arg4[%c0_14, %c0_15] : memref<128x128xf32, #tpu.memory_space<vmem>>, vector<128x128xf32>
      %30 = arith.truncf %29 : vector<128x128xf32> to vector<128x128xbf16>
      %cst_16 = arith.constant dense<0.000000e+00> : vector<128x128xf32>
      %31 = tpu.matmul %28, %30, %cst_16 {dimension_numbers = #tpu.dot_dimension_numbers<[1], [0], [0], [1], [0, 0, 1, 1], [], []>} : vector<128x128xbf16>, vector<128x128xbf16>, vector<128x128xf32> -> vector<128x128xf32>
      %c0_17 = arith.constant 0 : index
      %c0_18 = arith.constant 0 : index
      %32 = vector.load %arg5[%c0_17, %c0_18] : memref<1x128xf32, #tpu.memory_space<vmem>>, vector<1x128xf32>
      %33 = vector.broadcast %32 : vector<1x128xf32> to vector<128x128xf32>
      %34 = arith.addf %31, %33 : vector<128x128xf32>
      %cst_19 = arith.constant 0.000000e+00 : f32
      %35 = vector.broadcast %cst_19 : f32 to vector<128x128xf32>
      %36 = arith.maximumf %34, %35 : vector<128x128xf32>
      %cst_20 = arith.constant dense<0.000000e+00> : vector<128xf32>
      %37 = vector.multi_reduction <add>, %36, %cst_20 [1] : vector<128x128xf32> to vector<128xf32>
      %38 = vector.shape_cast %37 : vector<128xf32> to vector<128x1xf32>
      %cst_21 = arith.constant 0.0416666679 : f32
      %39 = vector.broadcast %cst_21 : f32 to vector<128x1xf32>
      %40 = arith.mulf %38, %39 : vector<128x1xf32>
      %41 = arith.mulf %36, %36 : vector<128x128xf32>
      %cst_22 = arith.constant dense<0.000000e+00> : vector<128xf32>
      %42 = vector.multi_reduction <add>, %41, %cst_22 [1] : vector<128x128xf32> to vector<128xf32>
      %43 = vector.shape_cast %42 : vector<128xf32> to vector<128x1xf32>
      %cst_23 = arith.constant 0.0416666679 : f32
      %44 = vector.broadcast %cst_23 : f32 to vector<128x1xf32>
      %45 = arith.mulf %43, %44 : vector<128x1xf32>
      %46 = arith.mulf %40, %40 : vector<128x1xf32>
      %47 = arith.subf %45, %46 : vector<128x1xf32>
      %48 = vector.broadcast %40 : vector<128x1xf32> to vector<128x128xf32>
      %49 = arith.subf %36, %48 : vector<128x128xf32>
      %cst_24 = arith.constant 9.99999974E-6 : f32
      %50 = vector.broadcast %cst_24 : f32 to vector<128x1xf32>
      %51 = arith.addf %47, %50 : vector<128x1xf32>
      %52 = math.rsqrt %51 : vector<128x1xf32>
      %53 = vector.broadcast %52 : vector<128x1xf32> to vector<128x128xf32>
      %54 = arith.mulf %49, %53 : vector<128x128xf32>
      %c0_25 = arith.constant 0 : index
      %c0_26 = arith.constant 0 : index
      %55 = vector.load %arg6[%c0_25, %c0_26] : memref<1x128xf32, #tpu.memory_space<vmem>>, vector<1x128xf32>
      %56 = vector.broadcast %55 : vector<1x128xf32> to vector<128x128xf32>
      %57 = arith.mulf %54, %56 : vector<128x128xf32>
      %c0_27 = arith.constant 0 : index
      %c0_28 = arith.constant 0 : index
      %58 = vector.load %arg7[%c0_27, %c0_28] : memref<1x128xf32, #tpu.memory_space<vmem>>, vector<1x128xf32>
      %59 = vector.broadcast %58 : vector<1x128xf32> to vector<128x128xf32>
      %60 = arith.addf %57, %59 : vector<128x128xf32>
      %c0_29 = arith.constant 0 : index
      %c0_30 = arith.constant 0 : index
      %61 = vector.load %arg8[%c0_29, %c0_30] : memref<128x128xf32, #tpu.memory_space<vmem>>, vector<128x128xf32>
      tpu.vector_store %arg8[%c0_29, %c0_30], %60 {strides = array<i32>} : memref<128x128xf32, #tpu.memory_space<vmem>>, vector<128x128xf32>,
    } else {
    }
    return
  }
  func.func @transform_0(%arg0: i32, %arg1: i32) -> (i32, i32) {
    %c0_i32 = arith.constant 0 : i32
    return %arg0, %arg1 : i32, i32
  }
  func.func @transform_1(%arg0: i32, %arg1: i32) -> (i32, i32) {
    %c0_i32 = arith.constant 0 : i32
    %c0_i32_0 = arith.constant 0 : i32
    return %arg1, %c0_i32 : i32, i32
  }
  func.func @transform_2(%arg0: i32, %arg1: i32) -> (i32, i32) {
    %c0_i32 = arith.constant 0 : i32
    %c0_i32_0 = arith.constant 0 : i32
    %c0_i32_1 = arith.constant 0 : i32
    return %c0_i32, %c0_i32_0 : i32, i32
  }
  func.func @transform_3(%arg0: i32, %arg1: i32) -> (i32, i32) {
    %c0_i32 = arith.constant 0 : i32
    %c0_i32_0 = arith.constant 0 : i32
    %c0_i32_1 = arith.constant 0 : i32
    return %c0_i32, %c0_i32_0 : i32, i32
  }
  func.func @transform_4(%arg0: i32, %arg1: i32) -> (i32, i32) {
    %c0_i32 = arith.constant 0 : i32
    %c0_i32_0 = arith.constant 0 : i32
    %c0_i32_1 = arith.constant 0 : i32
    return %c0_i32, %c0_i32_0 : i32, i32
  }
  func.func @transform_5(%arg0: i32, %arg1: i32) -> (i32, i32) {
    %c0_i32 = arith.constant 0 : i32
    %c0_i32_0 = arith.constant 0 : i32
    %c0_i32_1 = arith.constant 0 : i32
    return %c0_i32, %c0_i32_0 : i32, i32
  }
  func.func @transform_6(%arg0: i32, %arg1: i32) -> (i32, i32) {
    %c0_i32 = arith.constant 0 : i32
    %c0_i32_0 = arith.constant 0 : i32
    return %arg0, %c0_i32 : i32, i32
  }
}

</mosaic_0001>

<llo_original>
// kernel: graphsage_forward.1
$region0: #{graphsage_forward.1}
  #allocation0 [shape = 'u32[]', space=smem, size = 0x4, offset = 0x4, fixed_abs, tag = 'smem constant byte address 0x4 - core index']
  #allocation1 [shape = 'u32[144,128]{1,0:T(1,128)}', space=vmem, size = 0x12000, scoped, tag = 'internal scratch']
  #allocation2 [shape = 'f32[128,128]{1,0:T(8,128)}', space=vmem, size = 0x10000, scoped, tag = 'scratch operand']
  %s0 = inlined_call_operand.vmem [shape: f32[256,256], index: 0, kind: input, shape index: {}]
  %s1 = inlined_call_operand.vmem [shape: f32[256,128], index: 1, kind: input, shape index: {}]
  %s2 = inlined_call_operand.vmem [shape: f32[128,128], index: 2, kind: input, shape index: {}]
  %s3 = inlined_call_operand.vmem [shape: f32[1,128], index: 3, kind: input, shape index: {}]
  %s4 = inlined_call_operand.vmem [shape: f32[1,128], index: 4, kind: input, shape index: {}]
  %s5 = inlined_call_operand.vmem [shape: f32[1,128], index: 5, kind: input, shape index: {}]
  %s6 = inlined_call_operand.vmem [shape: f32[256,128], index: 6, kind: output, shape index: {}]
  %s7 = sld [smem:[#allocation0]]
  $region103: #{graphsage_forward.1} parent=0
    _
  %s9 = ssub.s32 1, %s7
  %s10 = scalar_select 0, %s9, %s7
  $region1: #{graphsage_forward.1} parent=0
    #allocation3 [shape = 'u8[131072]{0}', space=vmem, size = 0x20000, scoped, tag = 'input window, operand 0']
    loop: start=0, step=1, limit=6
    $region2: #{graphsage_forward.1} parent=1 // loop_pre_header
      _
    $region3: #{graphsage_forward.1} parent=1 // loop_header
      %s12 = sphi 0, %s16
      %p13 = scmp.ge.s32.totalorder %s12, 6
      %s19 = sphi 0, %s31
      %s20 = sphi 0, %s27
      %s21 = sphi 0, %s19
      %s22 = sphi 0, %s20
      %s23 = sphi 0, %s21
      %s24 = sphi 0, %s22
      %s36 = sphi 0, %s38
      %s39 = sphi 0, %s36
      %s40 = sphi 0, %s39
      %s56 = sphi 0, %s40
      %s62 = sphi 0, %s64
      %s65 = sphi 0, %s62
      %s66 = sphi 0, %s65
      %s82 = sphi 0, %s66
      %s86 = sphi 0, %s86
      %s88 = sphi 0, %s86
      %s89 = sphi 0, %s88
      %s103 = sphi 0, %s89
      %s107 = sphi 0, %s107
      %s109 = sphi 0, %s107
      %s110 = sphi 0, %s109
      %s124 = sphi 0, %s110
      %s128 = sphi 0, %s128
      %s130 = sphi 0, %s128
      %s131 = sphi 0, %s130
      %s145 = sphi 0, %s131
      %s149 = sphi 0, %s149
      %s151 = sphi 0, %s149
      %s152 = sphi 0, %s151
      %s166 = sphi 0, %s152
      %s172 = sphi 0, %s174
      %s175 = sphi 0, %s172
      %s176 = sphi 0, %s175
      %s192 = sphi 0, %s176
    $region4: #{graphsage_forward.1} parent=1 // loop_header_branch
      %15 = sbr.rel (%p13) target = $region8
    $region5: #{graphsage_forward.1} parent=1 // loop_body
      %s17 = ssub.s32 %s12, 1
      %s18 = ssub.s32 %s12, 2
      %s25 = sadd.s32 1, %s20
      %p26 = scmp.ge.s32.totalorder %s25, 2
      %s27 = scalar_select %p26, 0, %s25
      %s28 = sadd.s32 1, %s19
      %s29 = scalar_select %p26, %s28, %s19
      %p30 = scmp.ge.s32.totalorder %s29, 2
      %s31 = scalar_select %p30, 0, %s29
      %s32 = ssub.s32 %s19, %s31
      %s33 = ssub.s32 %s20, %s27
      %s34 = sor.u32 %s32, %s33
      %p35 = scmp.eq.s32.totalorder %s34, 0
      %s37 = sadd.s32 %s36, 1
      %s38 = scalar_select %p35, %s36, %s37
      %p41 = pneg %p35
      %p42 = scmp.eq.s32.totalorder %s12, 3
      %p43 = por %p41, %p42
      %p44 = scmp.ne.s32.totalorder %s36, %s39
      %p45 = scmp.eq.s32.totalorder %s12, 0
      %p46 = por %p44, %p45
      %p47 = scmp.ne.s32.totalorder %s36, %s39
      %p48 = scmp.eq.s32.totalorder %s17, 3
      %p49 = por %p47, %p48
      %p50 = scmp.ne.s32.totalorder %s39, %s40
      %p51 = scmp.eq.s32.totalorder %s17, 0
      %p52 = por %p50, %p51
      %p53 = scmp.ne.s32.totalorder %s39, %s40
      %p54 = scmp.eq.s32.totalorder %s18, 3
      %p55 = por %p53, %p54
      %p57 = scmp.ne.s32.totalorder %s40, %s56
      %p58 = scmp.eq.s32.totalorder %s18, 0
      %p59 = por %p57, %p58
      %s60 = ssub.s32 %s20, %s27
      %p61 = scmp.eq.s32.totalorder %s60, 0
      %s63 = sadd.s32 %s62, 1
      %s64 = scalar_select %p61, %s62, %s63
      %p67 = pneg %p61
      %p68 = scmp.eq.s32.totalorder %s12, 3
      %p69 = por %p67, %p68
      %p70 = scmp.ne.s32.totalorder %s62, %s65
      %p71 = scmp.eq.s32.totalorder %s12, 0
      %p72 = por %p70, %p71
      %p73 = scmp.ne.s32.totalorder %s62, %s65
      %p74 = scmp.eq.s32.totalorder %s17, 3
      %p75 = por %p73, %p74
      %p76 = scmp.ne.s32.totalorder %s65, %s66
      %p77 = scmp.eq.s32.totalorder %s17, 0
      %p78 = por %p76, %p77
      %p79 = scmp.ne.s32.totalorder %s65, %s66
      %p80 = scmp.eq.s32.totalorder %s18, 3
      %p81 = por %p79, %p80
      %p83 = scmp.ne.s32.totalorder %s66, %s82
      %p84 = scmp.eq.s32.totalorder %s18, 0
      %p85 = por %p83, %p84
      %s87 = sadd.s32 %s86, 1
      %p90 = scmp.eq.s32.totalorder %s12, 3
      %p91 = scmp.ne.s32.totalorder %s86, %s88
      %p92 = scmp.eq.s32.totalorder %s12, 0
      %p93 = por %p91, %p92
      %p94 = scmp.ne.s32.totalorder %s86, %s88
      %p95 = scmp.eq.s32.totalorder %s17, 3
      %p96 = por %p94, %p95
      %p97 = scmp.ne.s32.totalorder %s88, %s89
      %p98 = scmp.eq.s32.totalorder %s17, 0
      %p99 = por %p97, %p98
      %p100 = scmp.ne.s32.totalorder %s88, %s89
      %p101 = scmp.eq.s32.totalorder %s18, 3
      %p102 = por %p100, %p101
      %p104 = scmp.ne.s32.totalorder %s89, %s103
      %p105 = scmp.eq.s32.totalorder %s18, 0
      %p106 = por %p104, %p105
      %s108 = sadd.s32 %s107, 1
      %p111 = scmp.eq.s32.totalorder %s12, 3
      %p112 = scmp.ne.s32.totalorder %s107, %s109
      %p113 = scmp.eq.s32.totalorder %s12, 0
      %p114 = por %p112, %p113
      %p115 = scmp.ne.s32.totalorder %s107, %s109
      %p116 = scmp.eq.s32.totalorder %s17, 3
      %p117 = por %p115, %p116
      %p118 = scmp.ne.s32.totalorder %s109, %s110
      %p119 = scmp.eq.s32.totalorder %s17, 0
      %p120 = por %p118, %p119
      %p121 = scmp.ne.s32.totalorder %s109, %s110
      %p122 = scmp.eq.s32.totalorder %s18, 3
      %p123 = por %p121, %p122
      %p125 = scmp.ne.s32.totalorder %s110, %s124
      %p126 = scmp.eq.s32.totalorder %s18, 0
      %p127 = por %p125, %p126
      %s129 = sadd.s32 %s128, 1
      %p132 = scmp.eq.s32.totalorder %s12, 3
      %p133 = scmp.ne.s32.totalorder %s128, %s130
      %p134 = scmp.eq.s32.totalorder %s12, 0
      %p135 = por %p133, %p134
      %p136 = scmp.ne.s32.totalorder %s128, %s130
      %p137 = scmp.eq.s32.totalorder %s17, 3
      %p138 = por %p136, %p137
      %p139 = scmp.ne.s32.totalorder %s130, %s131
      %p140 = scmp.eq.s32.totalorder %s17, 0
      %p141 = por %p139, %p140
      %p142 = scmp.ne.s32.totalorder %s130, %s131
      %p143 = scmp.eq.s32.totalorder %s18, 3
      %p144 = por %p142, %p143
      %p146 = scmp.ne.s32.totalorder %s131, %s145
      %p147 = scmp.eq.s32.totalorder %s18, 0
      %p148 = por %p146, %p147
      %s150 = sadd.s32 %s149, 1
      %p153 = scmp.eq.s32.totalorder %s12, 3
      %p154 = scmp.ne.s32.totalorder %s149, %s151
      %p155 = scmp.eq.s32.totalorder %s12, 0
      %p156 = por %p154, %p155
      %p157 = scmp.ne.s32.totalorder %s149, %s151
      %p158 = scmp.eq.s32.totalorder %s17, 3
      %p159 = por %p157, %p158
      %p160 = scmp.ne.s32.totalorder %s151, %s152
      %p161 = scmp.eq.s32.totalorder %s17, 0
      %p162 = por %p160, %p161
      %p163 = scmp.ne.s32.totalorder %s151, %s152
      %p164 = scmp.eq.s32.totalorder %s18, 3
      %p165 = por %p163, %p164
      %p167 = scmp.ne.s32.totalorder %s152, %s166
      %p168 = scmp.eq.s32.totalorder %s18, 0
      %p169 = por %p167, %p168
      %s170 = ssub.s32 %s19, %s31
      %p171 = scmp.eq.s32.totalorder %s170, 0
      %s173 = sadd.s32 %s172, 1
      %s174 = scalar_select %p171, %s172, %s173
      %p177 = pneg %p171
      %p178 = scmp.eq.s32.totalorder %s12, 3
      %p179 = por %p177, %p178
      %p180 = scmp.ne.s32.totalorder %s172, %s175
      %p181 = scmp.eq.s32.totalorder %s12, 0
      %p182 = por %p180, %p181
      %p183 = scmp.ne.s32.totalorder %s172, %s175
      %p184 = scmp.eq.s32.totalorder %s17, 3
      %p185 = por %p183, %p184
      %p186 = scmp.ne.s32.totalorder %s175, %s176
      %p187 = scmp.eq.s32.totalorder %s17, 0
      %p188 = por %p186, %p187
      %p189 = scmp.ne.s32.totalorder %s175, %s176
      %p190 = scmp.eq.s32.totalorder %s18, 3
      %p191 = por %p189, %p190
      %p193 = scmp.ne.s32.totalorder %s176, %s192
      %p194 = scmp.eq.s32.totalorder %s18, 0
      %p195 = por %p193, %p194
      %p196 = scmp.le.s32.totalorder 1, %s12
      %p197 = scmp.lt.s32.totalorder %s12, 5
      %p198 = pnand %p196, %p197
      %p199 = pneg %p198
      // Predicated region
      $region9: #{graphsage_forward.1} parent=5 // pred_check
        _
      $region10: #{graphsage_forward.1} parent=5 // pred_check_branch
        %201 = sbr.rel (%p198) target = $region12
      $region11: #{graphsage_forward.1} parent=5 // pred_region
        %s202 = ssub.s32 %s12, 1
        // Predicated region
        $region13: #{graphsage_forward.1} parent=11 // pred_check
          %p203 = pneg %p99
        $region14: #{graphsage_forward.1} parent=11 // pred_check_branch
          %205 = sbr.rel (%p203) target = $region16
        $region15: #{graphsage_forward.1} parent=11 // pred_region
          _
        $region16: #{graphsage_forward.1} parent=11 // pred_fallthru
          _
        // Predicated region
        $region17: #{graphsage_forward.1} parent=11 // pred_check
          %p206 = pneg %p120
        $region18: #{graphsage_forward.1} parent=11 // pred_check_branch
          %208 = sbr.rel (%p206) target = $region20
        $region19: #{graphsage_forward.1} parent=11 // pred_region
          _
        $region20: #{graphsage_forward.1} parent=11 // pred_fallthru
          _
        // Predicated region
        $region21: #{graphsage_forward.1} parent=11 // pred_check
          %p209 = pneg %p141
        $region22: #{graphsage_forward.1} parent=11 // pred_check_branch
          %211 = sbr.rel (%p209) target = $region24
        $region23: #{graphsage_forward.1} parent=11 // pred_region
          _
        $region24: #{graphsage_forward.1} parent=11 // pred_fallthru
          _
        // Predicated region
        $region25: #{graphsage_forward.1} parent=11 // pred_check
          %p212 = pneg %p162
        $region26: #{graphsage_forward.1} parent=11 // pred_check_branch
          %214 = sbr.rel (%p212) target = $region28
        $region27: #{graphsage_forward.1} parent=11 // pred_region
          _
        $region28: #{graphsage_forward.1} parent=11 // pred_fallthru
          _
      $region12: #{graphsage_forward.1} parent=5 // pred_fallthru
        _
      %p215 = scmp.lt.s32.totalorder %s12, 4
      // Predicated region
      $region29: #{graphsage_forward.1} parent=5 // pred_check
        %p216 = pneg %p215
      $region30: #{graphsage_forward.1} parent=5 // pred_check_branch
        %218 = sbr.rel (%p216) target = $region32
      $region31: #{graphsage_forward.1} parent=5 // pred_region
        // Predicated region
        $region33: #{graphsage_forward.1} parent=31 // pred_check
          %p219 = pneg %p46
        $region34: #{graphsage_forward.1} parent=31 // pred_check_branch
          %221 = sbr.rel (%p219) target = $region36
        $region35: #{graphsage_forward.1} parent=31 // pred_region
          %s222 = sand.u32 %s36, 1
          %s223 = sand.u32 %s36, 1
          %s224 = smul.addr %s223, 128
          %s225 = scalar_lea.vmem [#allocation3], %s224
          %s226 = smul.u32 16, %s19
          %s227 = smul.addr %s226, 2
          %s228 = sadd.s32 %s20, %s227
          %s229 = smul.addr %s228, 8
          %s230 = scalar_lea.vmem %s0, %s229
          // Predicated region
          $region37: #{graphsage_forward.1} parent=35 // pred_check
            _
          $region38: #{graphsage_forward.1} parent=35 // pred_check_branch
            %232 = sbr.rel (0) target = $region40
          $region39: #{graphsage_forward.1} parent=35 // pred_region
            // Predicated region
            $region41: #{graphsage_forward.1} parent=39 // pred_check
              _
            $region42: #{graphsage_forward.1} parent=39 // pred_check_branch
              %234 = sbr.rel (0) target = $region44
            $region43: #{graphsage_forward.1} parent=39 // pred_region
              // Predicated region
              $region56: #{graphsage_forward.1} parent=43 // pred_check
                _
              $region57: #{graphsage_forward.1} parent=43 // pred_check_branch
                %280 = sbr.rel (0) target = $region59
              $region58: #{graphsage_forward.1} parent=43 // pred_region
                loop: start=0, step=1, limit=1
                $region60: #{graphsage_forward.1} parent=58 // loop_pre_header
                  _
                $region61: #{graphsage_forward.1} parent=58 // loop_header
                  %s282 = sphi 0, %s286
                  %p283 = scmp.ge.s32.totalorder %s282, 1
                  %s287 = sphi %s230, %s230
                  %s288 = sphi %s225, %s225
                $region62: #{graphsage_forward.1} parent=58 // loop_header_branch
                  %285 = sbr.rel (%p283) target = $region66
                $region63: #{graphsage_forward.1} parent=58 // loop_body
                  %v289 = vld [vmem:[%s287] sm:$0xff]
                  %290 = vst [vmem:[%s288] sm:$0xff] %v289
                  %v291 = vld [vmem:[%s287 + $0x10] sm:$0xff]
                  %292 = vst [vmem:[%s288 + $0x8] sm:$0xff] %v291
                  %v293 = vld [vmem:[%s287 + $0x20] sm:$0xff]
                  %294 = vst [vmem:[%s288 + $0x10] sm:$0xff] %v293
                  %v295 = vld [vmem:[%s287 + $0x30] sm:$0xff]
                  %296 = vst [vmem:[%s288 + $0x18] sm:$0xff] %v295
                  %v297 = vld [vmem:[%s287 + $0x40] sm:$0xff]
                  %298 = vst [vmem:[%s288 + $0x20] sm:$0xff] %v297
                  %v299 = vld [vmem:[%s287 + $0x50] sm:$0xff]
                  %300 = vst [vmem:[%s288 + $0x28] sm:$0xff] %v299
                  %v301 = vld [vmem:[%s287 + $0x60] sm:$0xff]
                  %302 = vst [vmem:[%s288 + $0x30] sm:$0xff] %v301
                  %v303 = vld [vmem:[%s287 + $0x70] sm:$0xff]
                  %304 = vst [vmem:[%s288 + $0x38] sm:$0xff] %v303
                  %v305 = vld [vmem:[%s287 + $0x80] sm:$0xff]
                  %306 = vst [vmem:[%s288 + $0x40] sm:$0xff] %v305
                  %v307 = vld [vmem:[%s287 + $0x90] sm:$0xff]
                  %308 = vst [vmem:[%s288 + $0x48] sm:$0xff] %v307
                  %v309 = vld [vmem:[%s287 + $0xa0] sm:$0xff]
                  %310 = vst [vmem:[%s288 + $0x50] sm:$0xff] %v309
                  %v311 = vld [vmem:[%s287 + $0xb0] sm:$0xff]
                  %312 = vst [vmem:[%s288 + $0x58] sm:$0xff] %v311
                  %v313 = vld [vmem:[%s287 + $0xc0] sm:$0xff]
                  %314 = vst [vmem:[%s288 + $0x60] sm:$0xff] %v313
                  %v315 = vld [vmem:[%s287 + $0xd0] sm:$0xff]
                  %316 = vst [vmem:[%s288 + $0x68] sm:$0xff] %v315
                  %v317 = vld [vmem:[%s287 + $0xe0] sm:$0xff]
                  %318 = vst [vmem:[%s288 + $0x70] sm:$0xff] %v317
                  %v319 = vld [vmem:[%s287 + $0xf0] sm:$0xff]
                  %320 = vst [vmem:[%s288 + $0x78] sm:$0xff] %v319
                $region64: #{graphsage_forward.1} parent=58 // loop_footer
                  %s286 = sadd.s32 1, %s282
                $region65: #{graphsage_forward.1} parent=58 // loop_footer_branch
                  %281 = sbr.rel target = $region61
                $region66: #{graphsage_forward.1} parent=58 // loop_exit
                  _
              $region59: #{graphsage_forward.1} parent=43 // pred_fallthru
                _
              // Predicated region
              $region67: #{graphsage_forward.1} parent=43 // pred_check
                _
              $region68: #{graphsage_forward.1} parent=43 // pred_check_branch
                %322 = sbr.rel target = $region70
              $region69: #{graphsage_forward.1} parent=43 // pred_region
                _
              $region70: #{graphsage_forward.1} parent=43 // pred_fallthru
                _
            $region44: #{graphsage_forward.1} parent=39 // pred_fallthru
              _
            // Predicated region
            $region45: #{graphsage_forward.1} parent=39 // pred_check
              _
            $region46: #{graphsage_forward.1} parent=39 // pred_check_branch
              %236 = sbr.rel target = $region48
            $region47: #{graphsage_forward.1} parent=39 // pred_region
              %s238 = ssub.s32 256, 1
              loop: start=0, step=1, limit=1
              $region49: #{graphsage_forward.1} parent=47 // loop_pre_header
                _
              $region50: #{graphsage_forward.1} parent=47 // loop_header
                %s240 = sphi 0, %s244
                %p241 = scmp.ge.s32.totalorder %s240, 1
                %s245 = sphi %s230, %s230
                %s246 = sphi %s225, %s225
              $region51: #{graphsage_forward.1} parent=47 // loop_header_branch
                %243 = sbr.rel (%p241) target = $region55
              $region52: #{graphsage_forward.1} parent=47 // loop_body
                %v247 = vld [vmem:[%s245] sm:%s238]
                %248 = vst [vmem:[%s246] sm:%s238] %v247
                %v249 = vld [vmem:[%s245 + $0x10] sm:%s238]
                %250 = vst [vmem:[%s246 + $0x8] sm:%s238] %v249
                %v251 = vld [vmem:[%s245 + $0x20] sm:%s238]
                %252 = vst [vmem:[%s246 + $0x10] sm:%s238] %v251
                %v253 = vld [vmem:[%s245 + $0x30] sm:%s238]
                %254 = vst [vmem:[%s246 + $0x18] sm:%s238] %v253
                %v255 = vld [vmem:[%s245 + $0x40] sm:%s238]
                %256 = vst [vmem:[%s246 + $0x20] sm:%s238] %v255
                %v257 = vld [vmem:[%s245 + $0x50] sm:%s238]
                %258 = vst [vmem:[%s246 + $0x28] sm:%s238] %v257
                %v259 = vld [vmem:[%s245 + $0x60] sm:%s238]
                %260 = vst [vmem:[%s246 + $0x30] sm:%s238] %v259
                %v261 = vld [vmem:[%s245 + $0x70] sm:%s238]
                %262 = vst [vmem:[%s246 + $0x38] sm:%s238] %v261
                %v263 = vld [vmem:[%s245 + $0x80] sm:%s238]
                %264 = vst [vmem:[%s246 + $0x40] sm:%s238] %v263
                %v265 = vld [vmem:[%s245 + $0x90] sm:%s238]
                %266 = vst [vmem:[%s246 + $0x48] sm:%s238] %v265
                %v267 = vld [vmem:[%s245 + $0xa0] sm:%s238]
                %268 = vst [vmem:[%s246 + $0x50] sm:%s238] %v267
                %v269 = vld [vmem:[%s245 + $0xb0] sm:%s238]
                %270 = vst [vmem:[%s246 + $0x58] sm:%s238] %v269
                %v271 = vld [vmem:[%s245 + $0xc0] sm:%s238]
                %272 = vst [vmem:[%s246 + $0x60] sm:%s238] %v271
                %v273 = vld [vmem:[%s245 + $0xd0] sm:%s238]
                %274 = vst [vmem:[%s246 + $0x68] sm:%s238] %v273
                %v275 = vld [vmem:[%s245 + $0xe0] sm:%s238]
                %276 = vst [vmem:[%s246 + $0x70] sm:%s238] %v275
                %v277 = vld [vmem:[%s245 + $0xf0] sm:%s238]
                %278 = vst [vmem:[%s246 + $0x78] sm:%s238] %v277
              $region53: #{graphsage_forward.1} parent=47 // loop_footer
                %s244 = sadd.s32 1, %s240
              $region54: #{graphsage_forward.1} parent=47 // loop_footer_branch
                %239 = sbr.rel target = $region50
              $region55: #{graphsage_forward.1} parent=47 // loop_exit
                _
            $region48: #{graphsage_forward.1} parent=39 // pred_fallthru
              _
          $region40: #{graphsage_forward.1} parent=35 // pred_fallthru
            _
          %323 = vnop
        $region36: #{graphsage_forward.1} parent=31 // pred_fallthru
          _
        // Predicated region
        $region71: #{graphsage_forward.1} parent=31 // pred_check
          %p324 = pneg %p72
        $region72: #{graphsage_forward.1} parent=31 // pred_check_branch
          %326 = sbr.rel (%p324) target = $region74
        $region73: #{graphsage_forward.1} parent=31 // pred_region
          %s327 = smul.u32 16, %s20
          %p328 = scmp.lt.s32.totalorder %s327, 31
          %s329 = scalar_select %p328, %s327, 31
          %s330 = smul.addr %s329, 8
          %s331 = scalar_lea.vmem %s1, %s330
          %s332 = smul.u32 16, %s20
        $region74: #{graphsage_forward.1} parent=31 // pred_fallthru
          _
      $region32: #{graphsage_forward.1} parent=5 // pred_fallthru
        _
      %p333 = scmp.le.s32.totalorder 1, %s12
      %p334 = scmp.lt.s32.totalorder %s12, 5
      %p335 = pnand %p333, %p334
      %p336 = pneg %p335
      // Predicated region
      $region75: #{graphsage_forward.1} parent=5 // pred_check
        _
      $region76: #{graphsage_forward.1} parent=5 // pred_check_branch
        %338 = sbr.rel (%p335) target = $region78
      $region77: #{graphsage_forward.1} parent=5 // pred_region
        %s339 = ssub.s32 %s12, 1
        %s340 = sand.u32 %s39, 1
        %s341 = sand.u32 %s39, 1
        %s342 = smul.addr %s341, 128
        %s343 = scalar_lea.vmem [#allocation3], %s342
        // Predicated region
        $region79: #{graphsage_forward.1} parent=77 // pred_check
          %p344 = pneg %p52
        $region80: #{graphsage_forward.1} parent=77 // pred_check_branch
          %346 = sbr.rel (%p344) target = $region82
        $region81: #{graphsage_forward.1} parent=77 // pred_region
          _
        $region82: #{graphsage_forward.1} parent=77 // pred_fallthru
          _
        %s347 = sand.u32 %s39, 1
        %s348 = sand.u32 %s39, 1
        %s349 = smul.addr %s348, 128
        %s350 = scalar_lea.vmem [#allocation3], %s349
        %p351 = pneg %p52
        %p352 = pneg %p49
        %s353 = smul.u32 16, %s22
        %p354 = scmp.lt.s32.totalorder %s353, 31
        %s355 = scalar_select %p354, %s353, 31
        %s356 = smul.addr %s355, 8
        %s357 = scalar_lea.vmem %s1, %s356
        %p358 = pneg %p78
        %p359 = pneg %p75
        %p360 = pneg %p99
        %p361 = pneg %p96
        %p362 = pneg %p120
        %p363 = pneg %p117
        %p364 = pneg %p141
        %p365 = pneg %p138
        %p366 = pneg %p162
        %p367 = pneg %p159
        %p368 = pneg %p188
        %p369 = pneg %p185
        %s370 = smul.u32 16, %s21
        %p371 = scmp.lt.s32.totalorder %s370, 31
        %s372 = scalar_select %p371, %s370, 31
        %s373 = smul.addr %s372, 8
        %s374 = scalar_lea.vmem %s6, %s373
        %s375 = smul.u32 16, %s21
        %s376 = smul.u32 16, %s22
        %p377 = scmp.lt.s32.totalorder %s376, 31
        %s378 = scalar_select %p377, %s376, 31
        %s379 = smul.addr %s378, 8
        %s380 = scalar_lea.vmem %s1, %s379
        %s381 = smul.u32 16, %s22
        %s382 = smul.u32 16, %s21
        %p383 = scmp.lt.s32.totalorder %s382, 31
        %s384 = scalar_select %p383, %s382, 31
        %s385 = smul.addr %s384, 8
        %s386 = scalar_lea.vmem %s6, %s385
        %s387 = smul.u32 16, %s21
        %p389 = scmp.eq.s32.totalorder %s22, 0
        // Predicated region
        $region83: #{graphsage_forward.1} parent=77 // pred_check
          %p390 = pneg %p389
        $region84: #{graphsage_forward.1} parent=77 // pred_check_branch
          %392 = sbr.rel (%p390) target = $region86
        $region85: #{graphsage_forward.1} parent=77 // pred_region
          %393 = vst [vmem:[#allocation2] sm:$0xff] 0.0
          %394 = vst [vmem:[#allocation2 + $0x8] sm:$0xff] 0.0
          %395 = vst [vmem:[#allocation2 + $0x10] sm:$0xff] 0.0
          %396 = vst [vmem:[#allocation2 + $0x18] sm:$0xff] 0.0
          %397 = vst [vmem:[#allocation2 + $0x20] sm:$0xff] 0.0
          %398 = vst [vmem:[#allocation2 + $0x28] sm:$0xff] 0.0
          %399 = vst [vmem:[#allocation2 + $0x30] sm:$0xff] 0.0
          %400 = vst [vmem:[#allocation2 + $0x38] sm:$0xff] 0.0
          %401 = vst [vmem:[#allocation2 + $0x40] sm:$0xff] 0.0
          %402 = vst [vmem:[#allocation2 + $0x48] sm:$0xff] 0.0
          %403 = vst [vmem:[#allocation2 + $0x50] sm:$0xff] 0.0
          %404 = vst [vmem:[#allocation2 + $0x58] sm:$0xff] 0.0
          %405 = vst [vmem:[#allocation2 + $0x60] sm:$0xff] 0.0
          %406 = vst [vmem:[#allocation2 + $0x68] sm:$0xff] 0.0
          %407 = vst [vmem:[#allocation2 + $0x70] sm:$0xff] 0.0
          %408 = vst [vmem:[#allocation2 + $0x78] sm:$0xff] 0.0
        $region86: #{graphsage_forward.1} parent=77 // pred_fallthru
          _
        %v409 = vld [vmem:[%s343] sm:$0xff]
        %v410 = vld [vmem:[%s343 + $0x8] sm:$0xff]
        %v411 = vld [vmem:[%s343 + $0x10] sm:$0xff]
        %v412 = vld [vmem:[%s343 + $0x18] sm:$0xff]
        %v413 = vld [vmem:[%s343 + $0x20] sm:$0xff]
        %v414 = vld [vmem:[%s343 + $0x28] sm:$0xff]
        %v415 = vld [vmem:[%s343 + $0x30] sm:$0xff]
        %v416 = vld [vmem:[%s343 + $0x38] sm:$0xff]
        %v417 = vld [vmem:[%s343 + $0x40] sm:$0xff]
        %v418 = vld [vmem:[%s343 + $0x48] sm:$0xff]
        %v419 = vld [vmem:[%s343 + $0x50] sm:$0xff]
        %v420 = vld [vmem:[%s343 + $0x58] sm:$0xff]
        %v421 = vld [vmem:[%s343 + $0x60] sm:$0xff]
        %v422 = vld [vmem:[%s343 + $0x68] sm:$0xff]
        %v423 = vld [vmem:[%s343 + $0x70] sm:$0xff]
        %v424 = vld [vmem:[%s343 + $0x78] sm:$0xff]
        %s425 = smul.u32 %s21, 128
        %v426 = vlaneseq
        %v427 = vshrl.u32 %v426, 7
        %v428 = vadd.s32 %v427, 8
        %v429 = vadd.s32 %v427, 16
        %v430 = vadd.s32 %v427, 24
        %v431 = vadd.s32 %v427, 32
        %v432 = vadd.s32 %v427, 40
        %v433 = vadd.s32 %v427, 48
        %v434 = vadd.s32 %v427, 56
        %v435 = vadd.s32 %v427, 64
        %v436 = vadd.s32 %v427, 72
        %v437 = vadd.s32 %v427, 80
        %v438 = vadd.s32 %v427, 88
        %v439 = vadd.s32 %v427, 96
        %v440 = vadd.s32 %v427, 104
        %v441 = vadd.s32 %v427, 112
        %v442 = vadd.s32 %v427, 120
        %v443 = vstv %s425
        %v444 = vadd.s32 %v443, %v427
        %v445 = vadd.s32 %v443, %v428
        %v446 = vadd.s32 %v443, %v429
        %v447 = vadd.s32 %v443, %v430
        %v448 = vadd.s32 %v443, %v431
        %v449 = vadd.s32 %v443, %v432
        %v450 = vadd.s32 %v443, %v433
        %v451 = vadd.s32 %v443, %v434
        %v452 = vadd.s32 %v443, %v435
        %v453 = vadd.s32 %v443, %v436
        %v454 = vadd.s32 %v443, %v437
        %v455 = vadd.s32 %v443, %v438
        %v456 = vadd.s32 %v443, %v439
        %v457 = vadd.s32 %v443, %v440
        %v458 = vadd.s32 %v443, %v441
        %v459 = vadd.s32 %v443, %v442
        %s460 = smul.u32 %s22, 128
        %v461 = vlaneseq
        %v462 = vand.u32 %v461, 127
        %v463 = vstv %s460
        %v464 = vadd.s32 %v463, %v462
        %vm465 = vcmp.eq.s32.totalorder %v444, %v464
        %vm466 = vcmp.eq.s32.totalorder %v445, %v464
        %vm467 = vcmp.eq.s32.totalorder %v446, %v464
        %vm468 = vcmp.eq.s32.totalorder %v447, %v464
        %vm469 = vcmp.eq.s32.totalorder %v448, %v464
        %vm470 = vcmp.eq.s32.totalorder %v449, %v464
        %vm471 = vcmp.eq.s32.totalorder %v450, %v464
        %vm472 = vcmp.eq.s32.totalorder %v451, %v464
        %vm473 = vcmp.eq.s32.totalorder %v452, %v464
        %vm474 = vcmp.eq.s32.totalorder %v453, %v464
        %vm475 = vcmp.eq.s32.totalorder %v454, %v464
        %vm476 = vcmp.eq.s32.totalorder %v455, %v464
        %vm477 = vcmp.eq.s32.totalorder %v456, %v464
        %vm478 = vcmp.eq.s32.totalorder %v457, %v464
        %vm479 = vcmp.eq.s32.totalorder %v458, %v464
        %vm480 = vcmp.eq.s32.totalorder %v459, %v464
        %v481 = vsel %vm465, 1.0, 0.0
        %v482 = vsel %vm466, 1.0, 0.0
        %v483 = vsel %vm467, 1.0, 0.0
        %v484 = vsel %vm468, 1.0, 0.0
        %v485 = vsel %vm469, 1.0, 0.0
        %v486 = vsel %vm470, 1.0, 0.0
        %v487 = vsel %vm471, 1.0, 0.0
        %v488 = vsel %vm472, 1.0, 0.0
        %v489 = vsel %vm473, 1.0, 0.0
        %v490 = vsel %vm474, 1.0, 0.0
        %v491 = vsel %vm475, 1.0, 0.0
        %v492 = vsel %vm476, 1.0, 0.0
        %v493 = vsel %vm477, 1.0, 0.0
        %v494 = vsel %vm478, 1.0, 0.0
        %v495 = vsel %vm479, 1.0, 0.0
        %v496 = vsel %vm480, 1.0, 0.0
        %v497 = vadd.f32 %v409, %v481
        %v498 = vadd.f32 %v410, %v482
        %v499 = vadd.f32 %v411, %v483
        %v500 = vadd.f32 %v412, %v484
        %v501 = vadd.f32 %v413, %v485
        %v502 = vadd.f32 %v414, %v486
        %v503 = vadd.f32 %v415, %v487
        %v504 = vadd.f32 %v416, %v488
        %v505 = vadd.f32 %v417, %v489
        %v506 = vadd.f32 %v418, %v490
        %v507 = vadd.f32 %v419, %v491
        %v508 = vadd.f32 %v420, %v492
        %v509 = vadd.f32 %v421, %v493
        %v510 = vadd.f32 %v422, %v494
        %v511 = vadd.f32 %v423, %v495
        %v512 = vadd.f32 %v424, %v496
        %v513 = vld [vmem:[#allocation2] sm:$0xff]
        %v514 = vld [vmem:[#allocation2 + $0x8] sm:$0xff]
        %v515 = vld [vmem:[#allocation2 + $0x10] sm:$0xff]
        %v516 = vld [vmem:[#allocation2 + $0x18] sm:$0xff]
        %v517 = vld [vmem:[#allocation2 + $0x20] sm:$0xff]
        %v518 = vld [vmem:[#allocation2 + $0x28] sm:$0xff]
        %v519 = vld [vmem:[#allocation2 + $0x30] sm:$0xff]
        %v520 = vld [vmem:[#allocation2 + $0x38] sm:$0xff]
        %v521 = vld [vmem:[#allocation2 + $0x40] sm:$0xff]
        %v522 = vld [vmem:[#allocation2 + $0x48] sm:$0xff]
        %v523 = vld [vmem:[#allocation2 + $0x50] sm:$0xff]
        %v524 = vld [vmem:[#allocation2 + $0x58] sm:$0xff]
        %v525 = vld [vmem:[#allocation2 + $0x60] sm:$0xff]
        %v526 = vld [vmem:[#allocation2 + $0x68] sm:$0xff]
        %v527 = vld [vmem:[#allocation2 + $0x70] sm:$0xff]
        %v528 = vld [vmem:[#allocation2 + $0x78] sm:$0xff]
        %v529 = vpack.c.bf16 %v498, %v497
        %v530 = vpack.c.bf16 %v500, %v499
        %v531 = vpack.c.bf16 %v502, %v501
        %v532 = vpack.c.bf16 %v504, %v503
        %v533 = vpack.c.bf16 %v506, %v505
        %v534 = vpack.c.bf16 %v508, %v507
        %v535 = vpack.c.bf16 %v510, %v509
        %v536 = vpack.c.bf16 %v512, %v511
        %v537 = vld [vmem:[%s380] sm:$0xff]
        %v538 = vld [vmem:[%s380 + $0x8] sm:$0xff]
        %v539 = vld [vmem:[%s380 + $0x10] sm:$0xff]
        %v540 = vld [vmem:[%s380 + $0x18] sm:$0xff]
        %v541 = vld [vmem:[%s380 + $0x20] sm:$0xff]
        %v542 = vld [vmem:[%s380 + $0x28] sm:$0xff]
        %v543 = vld [vmem:[%s380 + $0x30] sm:$0xff]
        %v544 = vld [vmem:[%s380 + $0x38] sm:$0xff]
        %v545 = vld [vmem:[%s380 + $0x40] sm:$0xff]
        %v546 = vld [vmem:[%s380 + $0x48] sm:$0xff]
        %v547 = vld [vmem:[%s380 + $0x50] sm:$0xff]
        %v548 = vld [vmem:[%s380 + $0x58] sm:$0xff]
        %v549 = vld [vmem:[%s380 + $0x60] sm:$0xff]
        %v550 = vld [vmem:[%s380 + $0x68] sm:$0xff]
        %v551 = vld [vmem:[%s380 + $0x70] sm:$0xff]
        %v552 = vld [vmem:[%s380 + $0x78] sm:$0xff]
        %v553 = vpack.c.bf16 %v538, %v537
        %v554 = vpack.c.bf16 %v540, %v539
        %v555 = vpack.c.bf16 %v542, %v541
        %v556 = vpack.c.bf16 %v544, %v543
        %v557 = vpack.c.bf16 %v546, %v545
        %v558 = vpack.c.bf16 %v548, %v547
        %v559 = vpack.c.bf16 %v550, %v549
        %v560 = vpack.c.bf16 %v552, %v551
        %561 = vmatprep.subr.bf16.mxu0 0
        %562 = vmatpush1.bf16.msra.mxu0 %v560
        %563 = vmatprep.subr.bf16.mxu0 0
        %564 = vmatpush1.bf16.msra.mxu0 %v559
        %565 = vmatprep.subr.bf16.mxu0 0
        %566 = vmatpush1.bf16.msra.mxu0 %v558
        %567 = vmatprep.subr.bf16.mxu0 0
        %568 = vmatpush1.bf16.msra.mxu0 %v557
        %569 = vmatprep.subr.bf16.mxu0 0
        %570 = vmatpush1.bf16.msra.mxu0 %v556
        %571 = vmatprep.subr.bf16.mxu0 0
        %572 = vmatpush1.bf16.msra.mxu0 %v555
        %573 = vmatprep.subr.bf16.mxu0 0
        %574 = vmatpush1.bf16.msra.mxu0 %v554
        %575 = vmatprep.subr.bf16.mxu0 0
        %576 = vmatpush1.bf16.msra.mxu0 %v553
        %577 = vmatprep.subr.bf16.mxu0 0
        %578 = vmatpush2.bf16.msra.mxu0 0
        %579 = vmatprep.subr.bf16.mxu0 0
        %580 = vmatpush2.bf16.msra.mxu0 0
        %581 = vmatprep.subr.bf16.mxu0 0
        %582 = vmatpush2.bf16.msra.mxu0 0
        %583 = vmatprep.subr.bf16.mxu0 0
        %584 = vmatpush2.bf16.msra.mxu0 0
        %585 = vmatprep.subr.bf16.mxu0 0
        %586 = vmatpush2.bf16.msra.mxu0 0
        %587 = vmatprep.subr.bf16.mxu0 0
        %588 = vmatpush2.bf16.msra.mxu0 0
        %589 = vmatprep.subr.bf16.mxu0 0
        %590 = vmatpush2.bf16.msra.mxu0 0
        %591 = vmatprep.subr.bf16.mxu0 0
        %592 = vmatpush2.bf16.msra.mxu0 0
        %593 = vmatprep.mubr.bf16.mxu0 0
        %594 = vmatmul.mubr.bf16.gmra.mxu0 %v529
        %v595 = vpop.f32.mrf.mxu0
        %v596 = vadd.f32 0.0, %v595
        %v597 = vpop.f32.mrf.mxu0
        %v598 = vpop.f32.mrf.mxu0
        %v599 = vadd.f32 0.0, %v598
        %v600 = vpop.f32.mrf.mxu0
        %601 = vmatprep.mubr.bf16.mxu0 0
        %602 = vmatmul.mubr.bf16.gmra.mxu0 %v530
        %v603 = vpop.f32.mrf.mxu0
        %v604 = vadd.f32 0.0, %v603
        %v605 = vpop.f32.mrf.mxu0
        %v606 = vpop.f32.mrf.mxu0
        %v607 = vadd.f32 0.0, %v606
        %v608 = vpop.f32.mrf.mxu0
        %609 = vmatprep.mubr.bf16.mxu0 0
        %610 = vmatmul.mubr.bf16.gmra.mxu0 %v531
        %v611 = vpop.f32.mrf.mxu0
        %v612 = vadd.f32 0.0, %v611
        %v613 = vpop.f32.mrf.mxu0
        %v614 = vpop.f32.mrf.mxu0
        %v615 = vadd.f32 0.0, %v614
        %v616 = vpop.f32.mrf.mxu0
        %617 = vmatprep.mubr.bf16.mxu0 0
        %618 = vmatmul.mubr.bf16.gmra.mxu0 %v532
        %v619 = vpop.f32.mrf.mxu0
        %v620 = vadd.f32 0.0, %v619
        %v621 = vpop.f32.mrf.mxu0
        %v622 = vpop.f32.mrf.mxu0
        %v623 = vadd.f32 0.0, %v622
        %v624 = vpop.f32.mrf.mxu0
        %625 = vmatprep.mubr.bf16.mxu0 0
        %626 = vmatmul.mubr.bf16.gmra.mxu0 %v533
        %v627 = vpop.f32.mrf.mxu0
        %v628 = vadd.f32 0.0, %v627
        %v629 = vpop.f32.mrf.mxu0
        %v630 = vpop.f32.mrf.mxu0
        %v631 = vadd.f32 0.0, %v630
        %v632 = vpop.f32.mrf.mxu0
        %633 = vmatprep.mubr.bf16.mxu0 0
        %634 = vmatmul.mubr.bf16.gmra.mxu0 %v534
        %v635 = vpop.f32.mrf.mxu0
        %v636 = vadd.f32 0.0, %v635
        %v637 = vpop.f32.mrf.mxu0
        %v638 = vpop.f32.mrf.mxu0
        %v639 = vadd.f32 0.0, %v638
        %v640 = vpop.f32.mrf.mxu0
        %641 = vmatprep.mubr.bf16.mxu0 0
        %642 = vmatmul.mubr.bf16.gmra.mxu0 %v535
        %v643 = vpop.f32.mrf.mxu0
        %v644 = vadd.f32 0.0, %v643
        %v645 = vpop.f32.mrf.mxu0
        %v646 = vpop.f32.mrf.mxu0
        %v647 = vadd.f32 0.0, %v646
        %v648 = vpop.f32.mrf.mxu0
        %649 = vmatprep.mubr.bf16.mxu0 0
        %650 = vmatmul.mubr.bf16.gmra.mxu0 %v536
        %v651 = vpop.f32.mrf.mxu0
        %v652 = vadd.f32 0.0, %v651
        %v653 = vpop.f32.mrf.mxu0
        %v654 = vpop.f32.mrf.mxu0
        %v655 = vadd.f32 0.0, %v654
        %v656 = vpop.f32.mrf.mxu0
        %657 = vdwg.mxu0
        %v658 = vadd.f32 %v513, %v596
        %v659 = vadd.f32 %v514, %v599
        %v660 = vadd.f32 %v515, %v604
        %v661 = vadd.f32 %v516, %v607
        %v662 = vadd.f32 %v517, %v612
        %v663 = vadd.f32 %v518, %v615
        %v664 = vadd.f32 %v519, %v620
        %v665 = vadd.f32 %v520, %v623
        %v666 = vadd.f32 %v521, %v628
        %v667 = vadd.f32 %v522, %v631
        %v668 = vadd.f32 %v523, %v636
        %v669 = vadd.f32 %v524, %v639
        %v670 = vadd.f32 %v525, %v644
        %v671 = vadd.f32 %v526, %v647
        %v672 = vadd.f32 %v527, %v652
        %v673 = vadd.f32 %v528, %v655
        %674 = vst [vmem:[#allocation2] sm:$0xff] %v658
        %675 = vst [vmem:[#allocation2 + $0x8] sm:$0xff] %v659
        %676 = vst [vmem:[#allocation2 + $0x10] sm:$0xff] %v660
        %677 = vst [vmem:[#allocation2 + $0x18] sm:$0xff] %v661
        %678 = vst [vmem:[#allocation2 + $0x20] sm:$0xff] %v662
        %679 = vst [vmem:[#allocation2 + $0x28] sm:$0xff] %v663
        %680 = vst [vmem:[#allocation2 + $0x30] sm:$0xff] %v664
        %681 = vst [vmem:[#allocation2 + $0x38] sm:$0xff] %v665
        %682 = vst [vmem:[#allocation2 + $0x40] sm:$0xff] %v666
        %683 = vst [vmem:[#allocation2 + $0x48] sm:$0xff] %v667
        %684 = vst [vmem:[#allocation2 + $0x50] sm:$0xff] %v668
        %685 = vst [vmem:[#allocation2 + $0x58] sm:$0xff] %v669
        %686 = vst [vmem:[#allocation2 + $0x60] sm:$0xff] %v670
        %687 = vst [vmem:[#allocation2 + $0x68] sm:$0xff] %v671
        %688 = vst [vmem:[#allocation2 + $0x70] sm:$0xff] %v672
        %689 = vst [vmem:[#allocation2 + $0x78] sm:$0xff] %v673
        %p690 = scmp.eq.s32.totalorder %s22, 1
        // Predicated region
        $region87: #{graphsage_forward.1} parent=77 // pred_check
          %p691 = pneg %p690
        $region88: #{graphsage_forward.1} parent=77 // pred_check_branch
          %693 = sbr.rel (%p691) target = $region90
        $region89: #{graphsage_forward.1} parent=77 // pred_region
          %v694 = vld [vmem:[#allocation2] sm:$0xff]
          %v695 = vld [vmem:[#allocation2 + $0x8] sm:$0xff]
          %v696 = vld [vmem:[#allocation2 + $0x10] sm:$0xff]
          %v697 = vld [vmem:[#allocation2 + $0x18] sm:$0xff]
          %v698 = vld [vmem:[#allocation2 + $0x20] sm:$0xff]
          %v699 = vld [vmem:[#allocation2 + $0x28] sm:$0xff]
          %v700 = vld [vmem:[#allocation2 + $0x30] sm:$0xff]
          %v701 = vld [vmem:[#allocation2 + $0x38] sm:$0xff]
          %v702 = vld [vmem:[#allocation2 + $0x40] sm:$0xff]
          %v703 = vld [vmem:[#allocation2 + $0x48] sm:$0xff]
          %v704 = vld [vmem:[#allocation2 + $0x50] sm:$0xff]
          %v705 = vld [vmem:[#allocation2 + $0x58] sm:$0xff]
          %v706 = vld [vmem:[#allocation2 + $0x60] sm:$0xff]
          %v707 = vld [vmem:[#allocation2 + $0x68] sm:$0xff]
          %v708 = vld [vmem:[#allocation2 + $0x70] sm:$0xff]
          %v709 = vld [vmem:[#allocation2 + $0x78] sm:$0xff]
          %v710 = vpack.c.bf16 %v695, %v694
          %v711 = vpack.c.bf16 %v697, %v696
          %v712 = vpack.c.bf16 %v699, %v698
          %v713 = vpack.c.bf16 %v701, %v700
          %v714 = vpack.c.bf16 %v703, %v702
          %v715 = vpack.c.bf16 %v705, %v704
          %v716 = vpack.c.bf16 %v707, %v706
          %v717 = vpack.c.bf16 %v709, %v708
          %v718 = vld [vmem:[%s2] sm:$0xff]
          %v719 = vld [vmem:[%s2 + $0x8] sm:$0xff]
          %v720 = vld [vmem:[%s2 + $0x10] sm:$0xff]
          %v721 = vld [vmem:[%s2 + $0x18] sm:$0xff]
          %v722 = vld [vmem:[%s2 + $0x20] sm:$0xff]
          %v723 = vld [vmem:[%s2 + $0x28] sm:$0xff]
          %v724 = vld [vmem:[%s2 + $0x30] sm:$0xff]
          %v725 = vld [vmem:[%s2 + $0x38] sm:$0xff]
          %v726 = vld [vmem:[%s2 + $0x40] sm:$0xff]
          %v727 = vld [vmem:[%s2 + $0x48] sm:$0xff]
          %v728 = vld [vmem:[%s2 + $0x50] sm:$0xff]
          %v729 = vld [vmem:[%s2 + $0x58] sm:$0xff]
          %v730 = vld [vmem:[%s2 + $0x60] sm:$0xff]
          %v731 = vld [vmem:[%s2 + $0x68] sm:$0xff]
          %v732 = vld [vmem:[%s2 + $0x70] sm:$0xff]
          %v733 = vld [vmem:[%s2 + $0x78] sm:$0xff]
          %v734 = vpack.c.bf16 %v719, %v718
          %v735 = vpack.c.bf16 %v721, %v720
          %v736 = vpack.c.bf16 %v723, %v722
          %v737 = vpack.c.bf16 %v725, %v724
          %v738 = vpack.c.bf16 %v727, %v726
          %v739 = vpack.c.bf16 %v729, %v728
          %v740 = vpack.c.bf16 %v731, %v730
          %v741 = vpack.c.bf16 %v733, %v732
          %v742 = vld [vmem:[%s3] sm:$0x1]
          %v744 = vlaneseq
          %v745 = vshrl.u32 %v744, 7
          %v746 = vsub.s32 0, %v745
          %v747 = vrot.slane %v742, %v746
          %749 = vmatprep.subr.bf16.mxu0 0
          %750 = vmatpush1.bf16.msra.mxu0 %v741
          %751 = vmatprep.subr.bf16.mxu0 0
          %752 = vmatpush1.bf16.msra.mxu0 %v740
          %753 = vmatprep.subr.bf16.mxu0 0
          %754 = vmatpush1.bf16.msra.mxu0 %v739
          %755 = vmatprep.subr.bf16.mxu0 0
          %756 = vmatpush1.bf16.msra.mxu0 %v738
          %757 = vmatprep.subr.bf16.mxu0 0
          %758 = vmatpush1.bf16.msra.mxu0 %v737
          %759 = vmatprep.subr.bf16.mxu0 0
          %760 = vmatpush1.bf16.msra.mxu0 %v736
          %761 = vmatprep.subr.bf16.mxu0 0
          %762 = vmatpush1.bf16.msra.mxu0 %v735
          %763 = vmatprep.subr.bf16.mxu0 0
          %764 = vmatpush1.bf16.msra.mxu0 %v734
          %765 = vmatprep.subr.bf16.mxu0 0
          %766 = vmatpush2.bf16.msra.mxu0 0
          %767 = vmatprep.subr.bf16.mxu0 0
          %768 = vmatpush2.bf16.msra.mxu0 0
          %769 = vmatprep.subr.bf16.mxu0 0
          %770 = vmatpush2.bf16.msra.mxu0 0
          %771 = vmatprep.subr.bf16.mxu0 0
          %772 = vmatpush2.bf16.msra.mxu0 0
          %773 = vmatprep.subr.bf16.mxu0 0
          %774 = vmatpush2.bf16.msra.mxu0 0
          %775 = vmatprep.subr.bf16.mxu0 0
          %776 = vmatpush2.bf16.msra.mxu0 0
          %777 = vmatprep.subr.bf16.mxu0 0
          %778 = vmatpush2.bf16.msra.mxu0 0
          %779 = vmatprep.subr.bf16.mxu0 0
          %780 = vmatpush2.bf16.msra.mxu0 0
          %781 = vmatprep.mubr.bf16.mxu0 0
          %782 = vmatmul.mubr.bf16.gmra.mxu0 %v710
          %v783 = vpop.f32.mrf.mxu0
          %v784 = vadd.f32 %v747, %v783
          %v785 = vpop.f32.mrf.mxu0
          %v786 = vpop.f32.mrf.mxu0
          %v787 = vadd.f32 %v747, %v786
          %v788 = vpop.f32.mrf.mxu0
          %789 = vmatprep.mubr.bf16.mxu0 0
          %790 = vmatmul.mubr.bf16.gmra.mxu0 %v711
          %v791 = vpop.f32.mrf.mxu0
          %v792 = vadd.f32 %v747, %v791
          %v793 = vpop.f32.mrf.mxu0
          %v794 = vpop.f32.mrf.mxu0
          %v795 = vadd.f32 %v747, %v794
          %v796 = vpop.f32.mrf.mxu0
          %797 = vmatprep.mubr.bf16.mxu0 0
          %798 = vmatmul.mubr.bf16.gmra.mxu0 %v712
          %v799 = vpop.f32.mrf.mxu0
          %v800 = vadd.f32 %v747, %v799
          %v801 = vpop.f32.mrf.mxu0
          %v802 = vpop.f32.mrf.mxu0
          %v803 = vadd.f32 %v747, %v802
          %v804 = vpop.f32.mrf.mxu0
          %805 = vmatprep.mubr.bf16.mxu0 0
          %806 = vmatmul.mubr.bf16.gmra.mxu0 %v713
          %v807 = vpop.f32.mrf.mxu0
          %v808 = vadd.f32 %v747, %v807
          %v809 = vpop.f32.mrf.mxu0
          %v810 = vpop.f32.mrf.mxu0
          %v811 = vadd.f32 %v747, %v810
          %v812 = vpop.f32.mrf.mxu0
          %813 = vmatprep.mubr.bf16.mxu0 0
          %814 = vmatmul.mubr.bf16.gmra.mxu0 %v714
          %v815 = vpop.f32.mrf.mxu0
          %v816 = vadd.f32 %v747, %v815
          %v817 = vpop.f32.mrf.mxu0
          %v818 = vpop.f32.mrf.mxu0
          %v819 = vadd.f32 %v747, %v818
          %v820 = vpop.f32.mrf.mxu0
          %821 = vmatprep.mubr.bf16.mxu0 0
          %822 = vmatmul.mubr.bf16.gmra.mxu0 %v715
          %v823 = vpop.f32.mrf.mxu0
          %v824 = vadd.f32 %v747, %v823
          %v825 = vpop.f32.mrf.mxu0
          %v826 = vpop.f32.mrf.mxu0
          %v827 = vadd.f32 %v747, %v826
          %v828 = vpop.f32.mrf.mxu0
          %829 = vmatprep.mubr.bf16.mxu0 0
          %830 = vmatmul.mubr.bf16.gmra.mxu0 %v716
          %v831 = vpop.f32.mrf.mxu0
          %v832 = vadd.f32 %v747, %v831
          %v833 = vpop.f32.mrf.mxu0
          %v834 = vpop.f32.mrf.mxu0
          %v835 = vadd.f32 %v747, %v834
          %v836 = vpop.f32.mrf.mxu0
          %837 = vmatprep.mubr.bf16.mxu0 0
          %838 = vmatmul.mubr.bf16.gmra.mxu0 %v717
          %v839 = vpop.f32.mrf.mxu0
          %v840 = vadd.f32 %v747, %v839
          %v841 = vpop.f32.mrf.mxu0
          %v842 = vpop.f32.mrf.mxu0
          %v843 = vadd.f32 %v747, %v842
          %v844 = vpop.f32.mrf.mxu0
          %845 = vdwg.mxu0
          %v846 = vmax.f32 %v784, 0.0
          %v847 = vmax.f32 %v787, 0.0
          %v848 = vmax.f32 %v792, 0.0
          %v849 = vmax.f32 %v795, 0.0
          %v850 = vmax.f32 %v800, 0.0
          %v851 = vmax.f32 %v803, 0.0
          %v852 = vmax.f32 %v808, 0.0
          %v853 = vmax.f32 %v811, 0.0
          %v854 = vmax.f32 %v816, 0.0
          %v855 = vmax.f32 %v819, 0.0
          %v856 = vmax.f32 %v824, 0.0
          %v857 = vmax.f32 %v827, 0.0
          %v858 = vmax.f32 %v832, 0.0
          %v859 = vmax.f32 %v835, 0.0
          %v860 = vmax.f32 %v840, 0.0
          %v861 = vmax.f32 %v843, 0.0
          %862 = vadd.xlane.f32.xlu0 %v846
          %v863 = vpop.xlane.xlu0 %862
          %864 = vadd.xlane.f32.xlu0 %v847
          %v865 = vpop.xlane.xlu0 %864
          %866 = vadd.xlane.f32.xlu0 %v848
          %v867 = vpop.xlane.xlu0 %866
          %868 = vadd.xlane.f32.xlu0 %v849
          %v869 = vpop.xlane.xlu0 %868
          %870 = vadd.xlane.f32.xlu0 %v850
          %v871 = vpop.xlane.xlu0 %870
          %872 = vadd.xlane.f32.xlu0 %v851
          %v873 = vpop.xlane.xlu0 %872
          %874 = vadd.xlane.f32.xlu0 %v852
          %v875 = vpop.xlane.xlu0 %874
          %876 = vadd.xlane.f32.xlu0 %v853
          %v877 = vpop.xlane.xlu0 %876
          %878 = vadd.xlane.f32.xlu0 %v854
          %v879 = vpop.xlane.xlu0 %878
          %880 = vadd.xlane.f32.xlu0 %v855
          %v881 = vpop.xlane.xlu0 %880
          %882 = vadd.xlane.f32.xlu0 %v856
          %v883 = vpop.xlane.xlu0 %882
          %884 = vadd.xlane.f32.xlu0 %v857
          %v885 = vpop.xlane.xlu0 %884
          %886 = vadd.xlane.f32.xlu0 %v858
          %v887 = vpop.xlane.xlu0 %886
          %888 = vadd.xlane.f32.xlu0 %v859
          %v889 = vpop.xlane.xlu0 %888
          %890 = vadd.xlane.f32.xlu0 %v860
          %v891 = vpop.xlane.xlu0 %890
          %892 = vadd.xlane.f32.xlu0 %v861
          %v893 = vpop.xlane.xlu0 %892
          %v894 = vmul.f32 %v863, 0.041666668
          %v895 = vmul.f32 %v865, 0.041666668
          %v896 = vmul.f32 %v867, 0.041666668
          %v897 = vmul.f32 %v869, 0.041666668
          %v898 = vmul.f32 %v871, 0.041666668
          %v899 = vmul.f32 %v873, 0.041666668
          %v900 = vmul.f32 %v875, 0.041666668
          %v901 = vmul.f32 %v877, 0.041666668
          %v902 = vmul.f32 %v879, 0.041666668
          %v903 = vmul.f32 %v881, 0.041666668
          %v904 = vmul.f32 %v883, 0.041666668
          %v905 = vmul.f32 %v885, 0.041666668
          %v906 = vmul.f32 %v887, 0.041666668
          %v907 = vmul.f32 %v889, 0.041666668
          %v908 = vmul.f32 %v891, 0.041666668
          %v909 = vmul.f32 %v893, 0.041666668
          %v910 = vmul.f32 %v846, %v846
          %v911 = vmul.f32 %v847, %v847
          %v912 = vmul.f32 %v848, %v848
          %v913 = vmul.f32 %v849, %v849
          %v914 = vmul.f32 %v850, %v850
          %v915 = vmul.f32 %v851, %v851
          %v916 = vmul.f32 %v852, %v852
          %v917 = vmul.f32 %v853, %v853
          %v918 = vmul.f32 %v854, %v854
          %v919 = vmul.f32 %v855, %v855
          %v920 = vmul.f32 %v856, %v856
          %v921 = vmul.f32 %v857, %v857
          %v922 = vmul.f32 %v858, %v858
          %v923 = vmul.f32 %v859, %v859
          %v924 = vmul.f32 %v860, %v860
          %v925 = vmul.f32 %v861, %v861
          %926 = vadd.xlane.f32.xlu0 %v910
          %v927 = vpop.xlane.xlu0 %926
          %928 = vadd.xlane.f32.xlu0 %v911
          %v929 = vpop.xlane.xlu0 %928
          %930 = vadd.xlane.f32.xlu0 %v912
          %v931 = vpop.xlane.xlu0 %930
          %932 = vadd.xlane.f32.xlu0 %v913
          %v933 = vpop.xlane.xlu0 %932
          %934 = vadd.xlane.f32.xlu0 %v914
          %v935 = vpop.xlane.xlu0 %934
          %936 = vadd.xlane.f32.xlu0 %v915
          %v937 = vpop.xlane.xlu0 %936
          %938 = vadd.xlane.f32.xlu0 %v916
          %v939 = vpop.xlane.xlu0 %938
          %940 = vadd.xlane.f32.xlu0 %v917
          %v941 = vpop.xlane.xlu0 %940
          %942 = vadd.xlane.f32.xlu0 %v918
          %v943 = vpop.xlane.xlu0 %942
          %944 = vadd.xlane.f32.xlu0 %v919
          %v945 = vpop.xlane.xlu0 %944
          %946 = vadd.xlane.f32.xlu0 %v920
          %v947 = vpop.xlane.xlu0 %946
          %948 = vadd.xlane.f32.xlu0 %v921
          %v949 = vpop.xlane.xlu0 %948
          %950 = vadd.xlane.f32.xlu0 %v922
          %v951 = vpop.xlane.xlu0 %950
          %952 = vadd.xlane.f32.xlu0 %v923
          %v953 = vpop.xlane.xlu0 %952
          %954 = vadd.xlane.f32.xlu0 %v924
          %v955 = vpop.xlane.xlu0 %954
          %956 = vadd.xlane.f32.xlu0 %v925
          %v957 = vpop.xlane.xlu0 %956
          %v958 = vmul.f32 %v927, 0.041666668
          %v959 = vmul.f32 %v929, 0.041666668
          %v960 = vmul.f32 %v931, 0.041666668
          %v961 = vmul.f32 %v933, 0.041666668
          %v962 = vmul.f32 %v935, 0.041666668
          %v963 = vmul.f32 %v937, 0.041666668
          %v964 = vmul.f32 %v939, 0.041666668
          %v965 = vmul.f32 %v941, 0.041666668
          %v966 = vmul.f32 %v943, 0.041666668
          %v967 = vmul.f32 %v945, 0.041666668
          %v968 = vmul.f32 %v947, 0.041666668
          %v969 = vmul.f32 %v949, 0.041666668
          %v970 = vmul.f32 %v951, 0.041666668
          %v971 = vmul.f32 %v953, 0.041666668
          %v972 = vmul.f32 %v955, 0.041666668
          %v973 = vmul.f32 %v957, 0.041666668
          %v974 = vmul.f32 %v894, %v894
          %v975 = vmul.f32 %v895, %v895
          %v976 = vmul.f32 %v896, %v896
          %v977 = vmul.f32 %v897, %v897
          %v978 = vmul.f32 %v898, %v898
          %v979 = vmul.f32 %v899, %v899
          %v980 = vmul.f32 %v900, %v900
          %v981 = vmul.f32 %v901, %v901
          %v982 = vmul.f32 %v902, %v902
          %v983 = vmul.f32 %v903, %v903
          %v984 = vmul.f32 %v904, %v904
          %v985 = vmul.f32 %v905, %v905
          %v986 = vmul.f32 %v906, %v906
          %v987 = vmul.f32 %v907, %v907
          %v988 = vmul.f32 %v908, %v908
          %v989 = vmul.f32 %v909, %v909
          %v990 = vsub.f32 %v958, %v974
          %v991 = vsub.f32 %v959, %v975
          %v992 = vsub.f32 %v960, %v976
          %v993 = vsub.f32 %v961, %v977
          %v994 = vsub.f32 %v962, %v978
          %v995 = vsub.f32 %v963, %v979
          %v996 = vsub.f32 %v964, %v980
          %v997 = vsub.f32 %v965, %v981
          %v998 = vsub.f32 %v966, %v982
          %v999 = vsub.f32 %v967, %v983
          %v1000 = vsub.f32 %v968, %v984
          %v1001 = vsub.f32 %v969, %v985
          %v1002 = vsub.f32 %v970, %v986
          %v1003 = vsub.f32 %v971, %v987
          %v1004 = vsub.f32 %v972, %v988
          %v1005 = vsub.f32 %v973, %v989
          %v1006 = vsub.f32 %v846, %v894
          %v1007 = vsub.f32 %v847, %v895
          %v1008 = vsub.f32 %v848, %v896
          %v1009 = vsub.f32 %v849, %v897
          %v1010 = vsub.f32 %v850, %v898
          %v1011 = vsub.f32 %v851, %v899
          %v1012 = vsub.f32 %v852, %v900
          %v1013 = vsub.f32 %v853, %v901
          %v1014 = vsub.f32 %v854, %v902
          %v1015 = vsub.f32 %v855, %v903
          %v1016 = vsub.f32 %v856, %v904
          %v1017 = vsub.f32 %v857, %v905
          %v1018 = vsub.f32 %v858, %v906
          %v1019 = vsub.f32 %v859, %v907
          %v1020 = vsub.f32 %v860, %v908
          %v1021 = vsub.f32 %v861, %v909
          %v1022 = vadd.f32 %v990, 1e-05
          %v1023 = vadd.f32 %v991, 1e-05
          %v1024 = vadd.f32 %v992, 1e-05
          %v1025 = vadd.f32 %v993, 1e-05
          %v1026 = vadd.f32 %v994, 1e-05
          %v1027 = vadd.f32 %v995, 1e-05
          %v1028 = vadd.f32 %v996, 1e-05
          %v1029 = vadd.f32 %v997, 1e-05
          %v1030 = vadd.f32 %v998, 1e-05
          %v1031 = vadd.f32 %v999, 1e-05
          %v1032 = vadd.f32 %v1000, 1e-05
          %v1033 = vadd.f32 %v1001, 1e-05
          %v1034 = vadd.f32 %v1002, 1e-05
          %v1035 = vadd.f32 %v1003, 1e-05
          %v1036 = vadd.f32 %v1004, 1e-05
          %v1037 = vadd.f32 %v1005, 1e-05
          %v1038 = vrsqrt.pop %v1022
          %v1039 = vrsqrt.pop %v1023
          %v1040 = vrsqrt.pop %v1024
          %v1041 = vrsqrt.pop %v1025
          %v1042 = vrsqrt.pop %v1026
          %v1043 = vrsqrt.pop %v1027
          %v1044 = vrsqrt.pop %v1028
          %v1045 = vrsqrt.pop %v1029
          %v1046 = vrsqrt.pop %v1030
          %v1047 = vrsqrt.pop %v1031
          %v1048 = vrsqrt.pop %v1032
          %v1049 = vrsqrt.pop %v1033
          %v1050 = vrsqrt.pop %v1034
          %v1051 = vrsqrt.pop %v1035
          %v1052 = vrsqrt.pop %v1036
          %v1053 = vrsqrt.pop %v1037
          %v1054 = vmul.f32 %v1006, %v1038
          %v1055 = vmul.f32 %v1007, %v1039
          %v1056 = vmul.f32 %v1008, %v1040
          %v1057 = vmul.f32 %v1009, %v1041
          %v1058 = vmul.f32 %v1010, %v1042
          %v1059 = vmul.f32 %v1011, %v1043
          %v1060 = vmul.f32 %v1012, %v1044
          %v1061 = vmul.f32 %v1013, %v1045
          %v1062 = vmul.f32 %v1014, %v1046
          %v1063 = vmul.f32 %v1015, %v1047
          %v1064 = vmul.f32 %v1016, %v1048
          %v1065 = vmul.f32 %v1017, %v1049
          %v1066 = vmul.f32 %v1018, %v1050
          %v1067 = vmul.f32 %v1019, %v1051
          %v1068 = vmul.f32 %v1020, %v1052
          %v1069 = vmul.f32 %v1021, %v1053
          %v1070 = vld [vmem:[%s4] sm:$0x1]
          %v1072 = vlaneseq
          %v1073 = vshrl.u32 %v1072, 7
          %v1074 = vsub.s32 0, %v1073
          %v1075 = vrot.slane %v1070, %v1074
          %v1077 = vmul.f32 %v1054, %v1075
          %v1078 = vmul.f32 %v1055, %v1075
          %v1079 = vmul.f32 %v1056, %v1075
          %v1080 = vmul.f32 %v1057, %v1075
          %v1081 = vmul.f32 %v1058, %v1075
          %v1082 = vmul.f32 %v1059, %v1075
          %v1083 = vmul.f32 %v1060, %v1075
          %v1084 = vmul.f32 %v1061, %v1075
          %v1085 = vmul.f32 %v1062, %v1075
          %v1086 = vmul.f32 %v1063, %v1075
          %v1087 = vmul.f32 %v1064, %v1075
          %v1088 = vmul.f32 %v1065, %v1075
          %v1089 = vmul.f32 %v1066, %v1075
          %v1090 = vmul.f32 %v1067, %v1075
          %v1091 = vmul.f32 %v1068, %v1075
          %v1092 = vmul.f32 %v1069, %v1075
          %v1093 = vld [vmem:[%s5] sm:$0x1]
          %v1095 = vlaneseq
          %v1096 = vshrl.u32 %v1095, 7
          %v1097 = vsub.s32 0, %v1096
          %v1098 = vrot.slane %v1093, %v1097
          %v1100 = vadd.f32 %v1077, %v1098
          %v1101 = vadd.f32 %v1078, %v1098
          %v1102 = vadd.f32 %v1079, %v1098
          %v1103 = vadd.f32 %v1080, %v1098
          %v1104 = vadd.f32 %v1081, %v1098
          %v1105 = vadd.f32 %v1082, %v1098
          %v1106 = vadd.f32 %v1083, %v1098
          %v1107 = vadd.f32 %v1084, %v1098
          %v1108 = vadd.f32 %v1085, %v1098
          %v1109 = vadd.f32 %v1086, %v1098
          %v1110 = vadd.f32 %v1087, %v1098
          %v1111 = vadd.f32 %v1088, %v1098
          %v1112 = vadd.f32 %v1089, %v1098
          %v1113 = vadd.f32 %v1090, %v1098
          %v1114 = vadd.f32 %v1091, %v1098
          %v1115 = vadd.f32 %v1092, %v1098
          %1116 = vst [vmem:[%s386] sm:$0xff] %v1100
          %1117 = vst [vmem:[%s386 + $0x8] sm:$0xff] %v1101
          %1118 = vst [vmem:[%s386 + $0x10] sm:$0xff] %v1102
          %1119 = vst [vmem:[%s386 + $0x18] sm:$0xff] %v1103
          %1120 = vst [vmem:[%s386 + $0x20] sm:$0xff] %v1104
          %1121 = vst [vmem:[%s386 + $0x28] sm:$0xff] %v1105
          %1122 = vst [vmem:[%s386 + $0x30] sm:$0xff] %v1106
          %1123 = vst [vmem:[%s386 + $0x38] sm:$0xff] %v1107
          %1124 = vst [vmem:[%s386 + $0x40] sm:$0xff] %v1108
          %1125 = vst [vmem:[%s386 + $0x48] sm:$0xff] %v1109
          %1126 = vst [vmem:[%s386 + $0x50] sm:$0xff] %v1110
          %1127 = vst [vmem:[%s386 + $0x58] sm:$0xff] %v1111
          %1128 = vst [vmem:[%s386 + $0x60] sm:$0xff] %v1112
          %1129 = vst [vmem:[%s386 + $0x68] sm:$0xff] %v1113
          %1130 = vst [vmem:[%s386 + $0x70] sm:$0xff] %v1114
          %1131 = vst [vmem:[%s386 + $0x78] sm:$0xff] %v1115
        $region90: #{graphsage_forward.1} parent=77 // pred_fallthru
          _
        %s1132 = smul.u32 16, %s21
        %p1133 = scmp.lt.s32.totalorder %s1132, 31
        %s1134 = scalar_select %p1133, %s1132, 31
        %s1135 = smul.addr %s1134, 8
        %s1136 = scalar_lea.vmem %s6, %s1135
        // Predicated region
        $region91: #{graphsage_forward.1} parent=77 // pred_check
          %p1137 = pneg %p185
        $region92: #{graphsage_forward.1} parent=77 // pred_check_branch
          %1139 = sbr.rel (%p1137) target = $region94
        $region93: #{graphsage_forward.1} parent=77 // pred_region
          %s1140 = smul.u32 16, %s21
        $region94: #{graphsage_forward.1} parent=77 // pred_fallthru
          _
      $region78: #{graphsage_forward.1} parent=5 // pred_fallthru
        _
      %p1141 = scmp.le.s32.totalorder 2, %s12
      // Predicated region
      $region95: #{graphsage_forward.1} parent=5 // pred_check
        %p1142 = pneg %p1141
      $region96: #{graphsage_forward.1} parent=5 // pred_check_branch
        %1144 = sbr.rel (%p1142) target = $region98
      $region97: #{graphsage_forward.1} parent=5 // pred_region
        %s1145 = ssub.s32 %s12, 2
        // Predicated region
        $region99: #{graphsage_forward.1} parent=97 // pred_check
          %p1146 = pneg %p191
        $region100: #{graphsage_forward.1} parent=97 // pred_check_branch
          %1148 = sbr.rel (%p1146) target = $region102
        $region101: #{graphsage_forward.1} parent=97 // pred_region
          %s1149 = smul.u32 16, %s23
          %p1150 = scmp.lt.s32.totalorder %s1149, 31
          %s1151 = scalar_select %p1150, %s1149, 31
          %s1152 = smul.addr %s1151, 8
          %s1153 = scalar_lea.vmem %s6, %s1152
        $region102: #{graphsage_forward.1} parent=97 // pred_fallthru
          _
      $region98: #{graphsage_forward.1} parent=5 // pred_fallthru
        _
    $region6: #{graphsage_forward.1} parent=1 // loop_footer
      %s16 = sadd.s32 1, %s12
    $region7: #{graphsage_forward.1} parent=1 // loop_footer_branch
      %11 = sbr.rel target = $region3
    $region8: #{graphsage_forward.1} parent=1 // loop_exit
      _

</llo_original>
